<compile_context>
chip_gen: v7x
topology: tpu7x:2x2x1
jax: 0.10.0
libtpu: 0.0.40
codegen_flags: <defaults>
</compile_context>

<pallas_src>
import functools

import numpy as np
import jax
import jax.numpy as jnp
from jax.experimental import pallas as pl
from jax.experimental.pallas import tpu as pltpu


_VMEM_LIMIT = 48 * 1024 * 1024  # safe on v5e/v6e (128 MiB) and v7x (64 MiB)


# ----------------------------------------------------------------------------
# Tiling helpers
# ----------------------------------------------------------------------------

def _round_up(v, m):
    return ((v + m - 1) // m) * m


def _pad_cout(cout, lane_tile=256):
    """Pad out-channels to a sublane-friendly size; pick the Cout tile.

    TODO(synk): make lane_tile generation-dependent (128 for v5e's 4x128^2 MXU,
    256 for v6e/v7x's 2x256^2 MXU) via pltpu.get_tpu_info().
    """
    cout_p = _round_up(cout, 8)
    if cout_p <= lane_tile:
        return cout_p, cout_p
    cout_p = _round_up(cout, lane_tile)
    return cout_p, lane_tile


def _pick_bt(batch, lout, target_lanes=512):
    """How many batches to pack into the matmul N (lane) dim per grid step."""
    bt = max(1, min(batch, target_lanes // max(lout, 1)))
    while bt > 1 and batch % bt != 0:   # keep the grid exact (no batch padding)
        bt -= 1
    return bt


# ----------------------------------------------------------------------------
# Pallas kernels
# ----------------------------------------------------------------------------

def _pack_taps(x_ref, xk_ref, *, bt, cin_p, ksize, stride, dilation, lout):
    """Stack k dilated taps (sublanes) x bt batches (lanes) into xk_ref.

    x_ref  : (bt, Cin_p, Lpad)     padded input strips, channels on sublanes
    xk_ref : (k*Cin_p, bt*Lout)    matmul RHS operand (VMEM scratch)
    """
    for b in range(bt):                        # static, unrolled at trace time
        for t in range(ksize):
            start = t * dilation
            if stride == 1:
                sl = x_ref[b, :, pl.ds(start, lout)]
            else:
                # TODO(synk): lane-strided read path; only stride == 1 is
                # exercised by the tests below.
                sl = x_ref[b, :, pl.ds(start, lout, stride=stride)]
            xk_ref[pl.ds(t * cin_p, cin_p), pl.ds(b * lout, lout)] = sl


def _conv_stats_kernel(x_ref, w_ref, ssum_ref, ssq_ref, xk_ref, *,
                       bt, cin_p, ksize, stride, dilation, lout):
    """Pass 1: conv (no bias) -> per-channel sum / sum-of-squares.

    ssum/ssq use the resident-accumulator pattern across the batch (last,
    "arbitrary") grid axis, so only (Cout_p, 1) per quantity ever hits HBM.
    """
    _pack_taps(x_ref, xk_ref, bt=bt, cin_p=cin_p, ksize=ksize,
               stride=stride, dilation=dilation, lout=lout)
    acc = jnp.dot(w_ref[...], xk_ref[...],
                  preferred_element_type=jnp.float32)       # (tn, bt*Lout) f32

    @pl.when(pl.program_id(1) == 0)
    def _():
        ssum_ref[...] = jnp.zeros_like(ssum_ref)
        ssq_ref[...] = jnp.zeros_like(ssq_ref)

    ssum_ref[...] += jnp.sum(acc, axis=-1, keepdims=True)
    ssq_ref[...] += jnp.sum(acc * acc, axis=-1, keepdims=True)


def _conv_affine_leaky_kernel(x_ref, w_ref, scale_ref, shift_ref, o_ref,
                              xk_ref, *, bt, cin_p, ksize, stride, dilation,
                              lout, slope):
    """Pass 2: conv + per-channel scale/shift (folded bias+BN) + LeakyReLU."""
    _pack_taps(x_ref, xk_ref, bt=bt, cin_p=cin_p, ksize=ksize,
               stride=stride, dilation=dilation, lout=lout)
    acc = jnp.dot(w_ref[...], xk_ref[...],
                  preferred_element_type=jnp.float32)       # (tn, bt*Lout) f32
    v = acc * scale_ref[...] + shift_ref[...]               # (tn,1) broadcast
    act = jnp.where(v >= 0, v, slope * v).astype(o_ref.dtype)
    for b in range(bt):                                     # lane-dense stores
        o_ref[b] = act[:, b * lout:(b + 1) * lout]


# ----------------------------------------------------------------------------
# Forward wrapper
# ----------------------------------------------------------------------------

@functools.partial(
    jax.jit,
    static_argnames=("stride", "padding", "dilation", "groups", "use_bias",
                     "normalization", "negative_slope", "eps", "compute_dtype"))
def conv1d_norm_leaky_relu_forward(params, x, *, stride=1, padding=0,
                                   dilation=1, groups=1, use_bias=False,
                                   normalization=True, negative_slope=0.01,
                                   eps=1e-5, compute_dtype=jnp.float32):
    """x: (B, Cin, L) float32 -> (B, Cout, Lout) float32.

    compute_dtype: dtype of the MXU operands (input slices / weights).
    float32 matches the PyTorch reference; bfloat16 takes the bf16 MXU fast
    path (f32 accumulation) at ~1e-3 relative error.
    """
    assert groups == 1, "TODO(synk): grouped Conv1d not implemented"
    x = x.astype(jnp.float32)
    B, Cin, L = x.shape
    w = params['conv_w'].astype(jnp.float32)        # (Cout, Cin, k) torch layout
    Cout, Cin_w, k = w.shape
    assert Cin_w == Cin
    Lout = (L + 2 * padding - dilation * (k - 1) - 1) // stride + 1
    assert Lout >= 1
    Lpad = L + 2 * padding

    Cin_p = _round_up(Cin, 8)                       # sublane-aligned K pieces
    Cout_p, tn = _pad_cout(Cout)
    n_co = Cout_p // tn
    KC = k * Cin_p
    bt = _pick_bt(B, Lout)
    n_bb = B // bt

    # One-time, cheap host-side layout prep (no im2col, no big copies).
    x_p = jnp.pad(x, ((0, 0), (0, Cin_p - Cin), (padding, padding)))
    x_p = x_p.astype(compute_dtype)
    # (Cout, Cin, k) -> (Cout_p, k*Cin_p) with rows ordered [tap0 ch*, tap1 ch*, ...]
    w2 = jnp.pad(w, ((0, Cout_p - Cout), (0, Cin_p - Cin), (0, 0)))
    w2 = jnp.transpose(w2, (0, 2, 1)).reshape(Cout_p, KC).astype(compute_dtype)

    if use_bias:
        bias = params['conv_b'].astype(jnp.float32)
    else:
        bias = jnp.zeros((Cout,), jnp.float32)
    bias_p = jnp.pad(bias, (0, Cout_p - Cout))

    kparams = dict(bt=bt, cin_p=Cin_p, ksize=k, stride=stride,
                   dilation=dilation, lout=Lout)

    # --- Pass 1 (only when normalizing): per-channel batch statistics -------
    if normalization:
        ssum, ssq = pl.pallas_call(
            functools.partial(_conv_stats_kernel, **kparams),
            grid=(n_co, n_bb),
            in_specs=[
                pl.BlockSpec((bt, Cin_p, Lpad), lambda c, bb: (bb, 0, 0)),
                pl.BlockSpec((tn, KC), lambda c, bb: (c, 0)),
            ],
            out_specs=[
                pl.BlockSpec((tn, 1), lambda c, bb: (c, 0)),
                pl.BlockSpec((tn, 1), lambda c, bb: (c, 0)),
            ],
            out_shape=(
                jax.ShapeDtypeStruct((Cout_p, 1), jnp.float32),
                jax.ShapeDtypeStruct((Cout_p, 1), jnp.float32),
            ),
            scratch_shapes=[pltpu.VMEM((KC, bt * Lout), compute_dtype)],
            compiler_params=pltpu.CompilerParams(
                dimension_semantics=("parallel", "arbitrary"),
                vmem_limit_bytes=_VMEM_LIMIT),
        )(x_p, w2)

        count = float(B * Lout)
        mean_c = ssum[:, 0] / count                          # mean of conv (no bias)
        var = jnp.maximum(ssq[:, 0] / count - mean_c * mean_c, 0.0)  # biased var
        gamma = jnp.pad(params['bn_gamma'].astype(jnp.float32),
                        (0, Cout_p - Cout), constant_values=1.0)
        beta = jnp.pad(params['bn_beta'].astype(jnp.float32),
                       (0, Cout_p - Cout))
        scale = gamma * jax.lax.rsqrt(var + eps)
        # (conv + bias - (mean_c + bias)) * scale + beta == conv*scale + shift:
        # the conv bias cancels under BatchNorm.
        shift = beta - mean_c * scale
    else:
        scale = jnp.ones((Cout_p,), jnp.float32)
        shift = bias_p

    scale = scale.reshape(Cout_p, 1)
    shift = shift.reshape(Cout_p, 1)

    # --- Pass 2: conv + folded bias/BatchNorm + LeakyReLU, straight to HBM ---
    out = pl.pallas_call(
        functools.partial(_conv_affine_leaky_kernel, slope=negative_slope,
                          **kparams),
        grid=(n_bb, n_co),
        in_specs=[
            pl.BlockSpec((bt, Cin_p, Lpad), lambda bb, c: (bb, 0, 0)),
            pl.BlockSpec((tn, KC), lambda bb, c: (c, 0)),
            pl.BlockSpec((tn, 1), lambda bb, c: (c, 0)),
            pl.BlockSpec((tn, 1), lambda bb, c: (c, 0)),
        ],
        out_specs=pl.BlockSpec((bt, tn, Lout), lambda bb, c: (bb, c, 0)),
        out_shape=jax.ShapeDtypeStruct((B, Cout_p, Lout), jnp.float32),
        scratch_shapes=[pltpu.VMEM((KC, bt * Lout), compute_dtype)],
        compiler_params=pltpu.CompilerParams(
            dimension_semantics=("parallel", "parallel"),
            vmem_limit_bytes=_VMEM_LIMIT),
    )(x_p, w2, scale, shift)

    return out[:, :Cout, :]


# ----------------------------------------------------------------------------
# Parameter construction (mirrors nn.Conv1d / nn.BatchNorm1d defaults)
# ----------------------------------------------------------------------------

def init_params(key, in_channels, num_filters, kernel_size, *, use_bias=False,
                normalization=True, groups=1):
    kw_key, kb_key = jax.random.split(key)
    fan_in = (in_channels // groups) * kernel_size
    bound = 1.0 / np.sqrt(fan_in)
    params = {
        'conv_w': jax.random.uniform(
            kw_key, (num_filters, in_channels // groups, kernel_size),
            jnp.float32, -bound, bound),
    }
    if use_bias:
        params['conv_b'] = jax.random.uniform(
            kb_key, (num_filters,), jnp.float32, -bound, bound)
    if normalization:
        params['bn_gamma'] = jnp.ones((num_filters,), jnp.float32)
        params['bn_beta'] = jnp.zeros((num_filters,), jnp.float32)
    return params


# ----------------------------------------------------------------------------
# Pure-JAX reference (for correctness checking of the Pallas path)
# ----------------------------------------------------------------------------

def reference_forward(params, x, *, stride=1, padding=0, dilation=1, groups=1,
                      use_bias=False, normalization=True, negative_slope=0.01,
                      eps=1e-5):
    x = x.astype(jnp.float32)
    w = params['conv_w'].astype(jnp.float32)
    y = jax.lax.conv_general_dilated(
        x, w, window_strides=(stride,), padding=[(padding, padding)],
        rhs_dilation=(dilation,), dimension_numbers=('NCH', 'OIH', 'NCH'),
        feature_group_count=groups)
    if use_bias:
        y = y + params['conv_b'][None, :, None]
    if normalization:
        mean = y.mean(axis=(0, 2))
        var = ((y - mean[None, :, None]) ** 2).mean(axis=(0, 2))
        y = ((y - mean[None, :, None]) / jnp.sqrt(var + eps)[None, :, None]
             * params['bn_gamma'][None, :, None]
             + params['bn_beta'][None, :, None])
    return jnp.where(y >= 0, y, negative_slope * y)


# ----------------------------------------------------------------------------
# Main
# ----------------------------------------------------------------------------

if __name__ == "__main__":
    key = jax.random.PRNGKey(0)
    kx, kp = jax.random.split(key)

    # Small shapes consistent with the module: (B, Cin, L) NCL input.
    B, Cin, L = 2, 4, 128
    num_filters, kernel_size, padding = 32, 3, 1
    Lout = (L + 2 * padding - (kernel_size - 1) - 1) // 1 + 1

    x = jax.random.normal(kx, (B, Cin, L), dtype=jnp.float32)

    # Config 1: module defaults (no conv bias, BatchNorm on), f32 MXU operands.
    p1 = init_params(kp, Cin, num_filters, kernel_size,
                     use_bias=False, normalization=True)
    out1 = conv1d_norm_leaky_relu_forward(
        p1, x, padding=padding, use_bias=False, normalization=True)
    out1 = jax.block_until_ready(out1)
    ref1 = reference_forward(p1, x, padding=padding, use_bias=False,
                             normalization=True)
    np.testing.assert_allclose(np.asarray(out1), np.asarray(ref1),
                               rtol=1e-4, atol=1e-4)
    assert out1.shape == (B, num_filters, Lout)

    # Config 2: conv bias on, normalization off, f32.
    p2 = init_params(kp, Cin, num_filters, kernel_size,
                     use_bias=True, normalization=False)
    out2 = conv1d_norm_leaky_relu_forward(
        p2, x, padding=padding, use_bias=True, normalization=False)
    out2 = jax.block_until_ready(out2)
    ref2 = reference_forward(p2, x, padding=padding, use_bias=True,
                             normalization=False)
    np.testing.assert_allclose(np.asarray(out2), np.asarray(ref2),
                               rtol=1e-4, atol=1e-4)

    # Config 3: bf16 MXU fast path (f32 accumulation), looser tolerance.
    out3 = conv1d_norm_leaky_relu_forward(
        p1, x, padding=padding, use_bias=False, normalization=True,
        compute_dtype=jnp.bfloat16)
    out3 = jax.block_until_ready(out3)
    np.testing.assert_allclose(np.asarray(out3), np.asarray(ref1),
                               rtol=5e-2, atol=5e-2)

    print("KERNEL_OK")
</pallas_src>

<mosaic_0001>
module attributes {stable_mosaic.version = 11 : i64} {
  func.func @_conv_stats_kernel(%arg0: i32, %arg1: i32, %arg2: memref<2x8x130xf32, #tpu.memory_space<vmem>>, %arg3: memref<32x24xf32, #tpu.memory_space<vmem>>, %arg4: memref<32x1xf32, #tpu.memory_space<vmem>>, %arg5: memref<32x1xf32, #tpu.memory_space<vmem>>, %arg6: memref<24x256xf32, #tpu.memory_space<vmem>>) attributes {dimension_semantics = [#tpu.dimension_semantics<parallel>, #tpu.dimension_semantics<arbitrary>], iteration_bounds = array<i64: 1, 1>, scalar_prefetch = 0 : i64, scratch_operands = 1 : i64, tpu.core_type = #tpu.core_type<tc>, window_params = [{transform_indices = @transform_0, window_bounds = array<i64: 2, 8, 130>}, {transform_indices = @transform_1, window_bounds = array<i64: 32, 24>}, {transform_indices = @transform_2, window_bounds = array<i64: 32, 1>}, {transform_indices = @transform_3, window_bounds = array<i64: 32, 1>}]} {
    %c0 = arith.constant 0 : index
    %c0_0 = arith.constant 0 : index
    %c0_1 = arith.constant 0 : index
    %0 = vector.load %arg2[%c0, %c0_0, %c0_1] : memref<2x8x130xf32, #tpu.memory_space<vmem>>, vector<1x8x128xf32>
    %1 = vector.shape_cast %0 : vector<1x8x128xf32> to vector<8x128xf32>
    %c0_2 = arith.constant 0 : index
    %c0_3 = arith.constant 0 : index
    %2 = vector.load %arg6[%c0_2, %c0_3] : memref<24x256xf32, #tpu.memory_space<vmem>>, vector<8x128xf32>
    tpu.vector_store %arg6[%c0_2, %c0_3], %1 {strides = array<i32>} : memref<24x256xf32, #tpu.memory_space<vmem>>, vector<8x128xf32>,
    %c0_4 = arith.constant 0 : index
    %c0_5 = arith.constant 0 : index
    %c1 = arith.constant 1 : index
    %3 = vector.load %arg2[%c0_4, %c0_5, %c1] : memref<2x8x130xf32, #tpu.memory_space<vmem>>, vector<1x8x128xf32>
    %4 = vector.shape_cast %3 : vector<1x8x128xf32> to vector<8x128xf32>
    %c8 = arith.constant 8 : index
    %c0_6 = arith.constant 0 : index
    %5 = vector.load %arg6[%c8, %c0_6] : memref<24x256xf32, #tpu.memory_space<vmem>>, vector<8x128xf32>
    tpu.vector_store %arg6[%c8, %c0_6], %4 {strides = array<i32>} : memref<24x256xf32, #tpu.memory_space<vmem>>, vector<8x128xf32>,
    %c0_7 = arith.constant 0 : index
    %c0_8 = arith.constant 0 : index
    %c2 = arith.constant 2 : index
    %6 = vector.load %arg2[%c0_7, %c0_8, %c2] : memref<2x8x130xf32, #tpu.memory_space<vmem>>, vector<1x8x128xf32>
    %7 = vector.shape_cast %6 : vector<1x8x128xf32> to vector<8x128xf32>
    %c16 = arith.constant 16 : index
    %c0_9 = arith.constant 0 : index
    %8 = vector.load %arg6[%c16, %c0_9] : memref<24x256xf32, #tpu.memory_space<vmem>>, vector<8x128xf32>
    tpu.vector_store %arg6[%c16, %c0_9], %7 {strides = array<i32>} : memref<24x256xf32, #tpu.memory_space<vmem>>, vector<8x128xf32>,
    %c1_10 = arith.constant 1 : index
    %c0_11 = arith.constant 0 : index
    %c0_12 = arith.constant 0 : index
    %9 = vector.load %arg2[%c1_10, %c0_11, %c0_12] : memref<2x8x130xf32, #tpu.memory_space<vmem>>, vector<1x8x128xf32>
    %10 = vector.shape_cast %9 : vector<1x8x128xf32> to vector<8x128xf32>
    %c0_13 = arith.constant 0 : index
    %c128 = arith.constant 128 : index
    %11 = vector.load %arg6[%c0_13, %c128] : memref<24x256xf32, #tpu.memory_space<vmem>>, vector<8x128xf32>
    tpu.vector_store %arg6[%c0_13, %c128], %10 {strides = array<i32>} : memref<24x256xf32, #tpu.memory_space<vmem>>, vector<8x128xf32>,
    %c1_14 = arith.constant 1 : index
    %c0_15 = arith.constant 0 : index
    %c1_16 = arith.constant 1 : index
    %12 = vector.load %arg2[%c1_14, %c0_15, %c1_16] : memref<2x8x130xf32, #tpu.memory_space<vmem>>, vector<1x8x128xf32>
    %13 = vector.shape_cast %12 : vector<1x8x128xf32> to vector<8x128xf32>
    %c8_17 = arith.constant 8 : index
    %c128_18 = arith.constant 128 : index
    %14 = vector.load %arg6[%c8_17, %c128_18] : memref<24x256xf32, #tpu.memory_space<vmem>>, vector<8x128xf32>
    tpu.vector_store %arg6[%c8_17, %c128_18], %13 {strides = array<i32>} : memref<24x256xf32, #tpu.memory_space<vmem>>, vector<8x128xf32>,
    %c1_19 = arith.constant 1 : index
    %c0_20 = arith.constant 0 : index
    %c2_21 = arith.constant 2 : index
    %15 = vector.load %arg2[%c1_19, %c0_20, %c2_21] : memref<2x8x130xf32, #tpu.memory_space<vmem>>, vector<1x8x128xf32>
    %16 = vector.shape_cast %15 : vector<1x8x128xf32> to vector<8x128xf32>
    %c16_22 = arith.constant 16 : index
    %c128_23 = arith.constant 128 : index
    %17 = vector.load %arg6[%c16_22, %c128_23] : memref<24x256xf32, #tpu.memory_space<vmem>>, vector<8x128xf32>
    tpu.vector_store %arg6[%c16_22, %c128_23], %16 {strides = array<i32>} : memref<24x256xf32, #tpu.memory_space<vmem>>, vector<8x128xf32>,
    %c0_24 = arith.constant 0 : index
    %c0_25 = arith.constant 0 : index
    %18 = vector.load %arg3[%c0_24, %c0_25] : memref<32x24xf32, #tpu.memory_space<vmem>>, vector<32x24xf32>
    %c0_26 = arith.constant 0 : index
    %c0_27 = arith.constant 0 : index
    %19 = vector.load %arg6[%c0_26, %c0_27] : memref<24x256xf32, #tpu.memory_space<vmem>>, vector<24x256xf32>
    %cst = arith.constant dense<0.000000e+00> : vector<32x256xf32>
    %20 = tpu.matmul %18, %19, %cst {dimension_numbers = #tpu.dot_dimension_numbers<[1], [0], [0], [1], [0, 0, 1, 1], [], []>} : vector<32x24xf32>, vector<24x256xf32>, vector<32x256xf32> -> vector<32x256xf32>
    %c0_i32 = arith.constant 0 : i32
    %21 = arith.cmpi eq, %arg1, %c0_i32 : i32
    %22 = arith.extui %21 : i1 to i32
    %c0_i32_28 = arith.constant 0 : i32
    %23 = arith.cmpi ne, %22, %c0_i32_28 : i32
    scf.if %23 {
      %cst_39 = arith.constant 0.000000e+00 : f32
      %35 = vector.broadcast %cst_39 : f32 to vector<32x1xf32>
      %c0_40 = arith.constant 0 : index
      %c0_41 = arith.constant 0 : index
      %36 = vector.load %arg4[%c0_40, %c0_41] : memref<32x1xf32, #tpu.memory_space<vmem>>, vector<32x1xf32>
      tpu.vector_store %arg4[%c0_40, %c0_41], %35 {strides = array<i32>} : memref<32x1xf32, #tpu.memory_space<vmem>>, vector<32x1xf32>,
      %cst_42 = arith.constant 0.000000e+00 : f32
      %37 = vector.broadcast %cst_42 : f32 to vector<32x1xf32>
      %c0_43 = arith.constant 0 : index
      %c0_44 = arith.constant 0 : index
      %38 = vector.load %arg5[%c0_43, %c0_44] : memref<32x1xf32, #tpu.memory_space<vmem>>, vector<32x1xf32>
      tpu.vector_store %arg5[%c0_43, %c0_44], %37 {strides = array<i32>} : memref<32x1xf32, #tpu.memory_space<vmem>>, vector<32x1xf32>,
    } else {
    }
    %c0_29 = arith.constant 0 : index
    %c0_30 = arith.constant 0 : index
    %24 = vector.load %arg4[%c0_29, %c0_30] : memref<32x1xf32, #tpu.memory_space<vmem>>, vector<32x1xf32>
    %cst_31 = arith.constant dense<0.000000e+00> : vector<32xf32>
    %25 = vector.multi_reduction <add>, %20, %cst_31 [1] : vector<32x256xf32> to vector<32xf32>
    %26 = vector.shape_cast %25 : vector<32xf32> to vector<32x1xf32>
    %27 = arith.addf %24, %26 : vector<32x1xf32>
    %c0_32 = arith.constant 0 : index
    %c0_33 = arith.constant 0 : index
    %28 = vector.load %arg4[%c0_32, %c0_33] : memref<32x1xf32, #tpu.memory_space<vmem>>, vector<32x1xf32>
    tpu.vector_store %arg4[%c0_32, %c0_33], %27 {strides = array<i32>} : memref<32x1xf32, #tpu.memory_space<vmem>>, vector<32x1xf32>,
    %c0_34 = arith.constant 0 : index
    %c0_35 = arith.constant 0 : index
    %29 = vector.load %arg5[%c0_34, %c0_35] : memref<32x1xf32, #tpu.memory_space<vmem>>, vector<32x1xf32>
    %30 = arith.mulf %20, %20 : vector<32x256xf32>
    %cst_36 = arith.constant dense<0.000000e+00> : vector<32xf32>
    %31 = vector.multi_reduction <add>, %30, %cst_36 [1] : vector<32x256xf32> to vector<32xf32>
    %32 = vector.shape_cast %31 : vector<32xf32> to vector<32x1xf32>
    %33 = arith.addf %29, %32 : vector<32x1xf32>
    %c0_37 = arith.constant 0 : index
    %c0_38 = arith.constant 0 : index
    %34 = vector.load %arg5[%c0_37, %c0_38] : memref<32x1xf32, #tpu.memory_space<vmem>>, vector<32x1xf32>
    tpu.vector_store %arg5[%c0_37, %c0_38], %33 {strides = array<i32>} : memref<32x1xf32, #tpu.memory_space<vmem>>, vector<32x1xf32>,
    return
  }
  func.func @transform_0(%arg0: i32, %arg1: i32) -> (i32, i32, i32) {
    %c0_i32 = arith.constant 0 : i32
    %c0_i32_0 = arith.constant 0 : i32
    %c0_i32_1 = arith.constant 0 : i32
    return %arg1, %c0_i32, %c0_i32_0 : i32, i32, i32
  }
  func.func @transform_1(%arg0: i32, %arg1: i32) -> (i32, i32) {
    %c0_i32 = arith.constant 0 : i32
    %c0_i32_0 = arith.constant 0 : i32
    return %arg0, %c0_i32 : i32, i32
  }
  func.func @transform_2(%arg0: i32, %arg1: i32) -> (i32, i32) {
    %c0_i32 = arith.constant 0 : i32
    %c0_i32_0 = arith.constant 0 : i32
    return %arg0, %c0_i32 : i32, i32
  }
  func.func @transform_3(%arg0: i32, %arg1: i32) -> (i32, i32) {
    %c0_i32 = arith.constant 0 : i32
    %c0_i32_0 = arith.constant 0 : i32
    return %arg0, %c0_i32 : i32, i32
  }
}

module attributes {stable_mosaic.version = 11 : i64} {
  func.func @_conv_affine_leaky_kernel(%arg0: i32, %arg1: i32, %arg2: memref<2x8x130xf32, #tpu.memory_space<vmem>>, %arg3: memref<32x24xf32, #tpu.memory_space<vmem>>, %arg4: memref<32x1xf32, #tpu.memory_space<vmem>>, %arg5: memref<32x1xf32, #tpu.memory_space<vmem>>, %arg6: memref<2x32x128xf32, #tpu.memory_space<vmem>>, %arg7: memref<24x256xf32, #tpu.memory_space<vmem>>) attributes {dimension_semantics = [#tpu.dimension_semantics<parallel>, #tpu.dimension_semantics<parallel>], iteration_bounds = array<i64: 1, 1>, scalar_prefetch = 0 : i64, scratch_operands = 1 : i64, tpu.core_type = #tpu.core_type<tc>, window_params = [{transform_indices = @transform_0, window_bounds = array<i64: 2, 8, 130>}, {transform_indices = @transform_1, window_bounds = array<i64: 32, 24>}, {transform_indices = @transform_2, window_bounds = array<i64: 32, 1>}, {transform_indices = @transform_3, window_bounds = array<i64: 32, 1>}, {transform_indices = @transform_4, window_bounds = array<i64: 2, 32, 128>}]} {
    %c0 = arith.constant 0 : index
    %c0_0 = arith.constant 0 : index
    %c0_1 = arith.constant 0 : index
    %0 = vector.load %arg2[%c0, %c0_0, %c0_1] : memref<2x8x130xf32, #tpu.memory_space<vmem>>, vector<1x8x128xf32>
    %1 = vector.shape_cast %0 : vector<1x8x128xf32> to vector<8x128xf32>
    %c0_2 = arith.constant 0 : index
    %c0_3 = arith.constant 0 : index
    %2 = vector.load %arg7[%c0_2, %c0_3] : memref<24x256xf32, #tpu.memory_space<vmem>>, vector<8x128xf32>
    tpu.vector_store %arg7[%c0_2, %c0_3], %1 {strides = array<i32>} : memref<24x256xf32, #tpu.memory_space<vmem>>, vector<8x128xf32>,
    %c0_4 = arith.constant 0 : index
    %c0_5 = arith.constant 0 : index
    %c1 = arith.constant 1 : index
    %3 = vector.load %arg2[%c0_4, %c0_5, %c1] : memref<2x8x130xf32, #tpu.memory_space<vmem>>, vector<1x8x128xf32>
    %4 = vector.shape_cast %3 : vector<1x8x128xf32> to vector<8x128xf32>
    %c8 = arith.constant 8 : index
    %c0_6 = arith.constant 0 : index
    %5 = vector.load %arg7[%c8, %c0_6] : memref<24x256xf32, #tpu.memory_space<vmem>>, vector<8x128xf32>
    tpu.vector_store %arg7[%c8, %c0_6], %4 {strides = array<i32>} : memref<24x256xf32, #tpu.memory_space<vmem>>, vector<8x128xf32>,
    %c0_7 = arith.constant 0 : index
    %c0_8 = arith.constant 0 : index
    %c2 = arith.constant 2 : index
    %6 = vector.load %arg2[%c0_7, %c0_8, %c2] : memref<2x8x130xf32, #tpu.memory_space<vmem>>, vector<1x8x128xf32>
    %7 = vector.shape_cast %6 : vector<1x8x128xf32> to vector<8x128xf32>
    %c16 = arith.constant 16 : index
    %c0_9 = arith.constant 0 : index
    %8 = vector.load %arg7[%c16, %c0_9] : memref<24x256xf32, #tpu.memory_space<vmem>>, vector<8x128xf32>
    tpu.vector_store %arg7[%c16, %c0_9], %7 {strides = array<i32>} : memref<24x256xf32, #tpu.memory_space<vmem>>, vector<8x128xf32>,
    %c1_10 = arith.constant 1 : index
    %c0_11 = arith.constant 0 : index
    %c0_12 = arith.constant 0 : index
    %9 = vector.load %arg2[%c1_10, %c0_11, %c0_12] : memref<2x8x130xf32, #tpu.memory_space<vmem>>, vector<1x8x128xf32>
    %10 = vector.shape_cast %9 : vector<1x8x128xf32> to vector<8x128xf32>
    %c0_13 = arith.constant 0 : index
    %c128 = arith.constant 128 : index
    %11 = vector.load %arg7[%c0_13, %c128] : memref<24x256xf32, #tpu.memory_space<vmem>>, vector<8x128xf32>
    tpu.vector_store %arg7[%c0_13, %c128], %10 {strides = array<i32>} : memref<24x256xf32, #tpu.memory_space<vmem>>, vector<8x128xf32>,
    %c1_14 = arith.constant 1 : index
    %c0_15 = arith.constant 0 : index
    %c1_16 = arith.constant 1 : index
    %12 = vector.load %arg2[%c1_14, %c0_15, %c1_16] : memref<2x8x130xf32, #tpu.memory_space<vmem>>, vector<1x8x128xf32>
    %13 = vector.shape_cast %12 : vector<1x8x128xf32> to vector<8x128xf32>
    %c8_17 = arith.constant 8 : index
    %c128_18 = arith.constant 128 : index
    %14 = vector.load %arg7[%c8_17, %c128_18] : memref<24x256xf32, #tpu.memory_space<vmem>>, vector<8x128xf32>
    tpu.vector_store %arg7[%c8_17, %c128_18], %13 {strides = array<i32>} : memref<24x256xf32, #tpu.memory_space<vmem>>, vector<8x128xf32>,
    %c1_19 = arith.constant 1 : index
    %c0_20 = arith.constant 0 : index
    %c2_21 = arith.constant 2 : index
    %15 = vector.load %arg2[%c1_19, %c0_20, %c2_21] : memref<2x8x130xf32, #tpu.memory_space<vmem>>, vector<1x8x128xf32>
    %16 = vector.shape_cast %15 : vector<1x8x128xf32> to vector<8x128xf32>
    %c16_22 = arith.constant 16 : index
    %c128_23 = arith.constant 128 : index
    %17 = vector.load %arg7[%c16_22, %c128_23] : memref<24x256xf32, #tpu.memory_space<vmem>>, vector<8x128xf32>
    tpu.vector_store %arg7[%c16_22, %c128_23], %16 {strides = array<i32>} : memref<24x256xf32, #tpu.memory_space<vmem>>, vector<8x128xf32>,
    %c0_24 = arith.constant 0 : index
    %c0_25 = arith.constant 0 : index
    %18 = vector.load %arg3[%c0_24, %c0_25] : memref<32x24xf32, #tpu.memory_space<vmem>>, vector<32x24xf32>
    %c0_26 = arith.constant 0 : index
    %c0_27 = arith.constant 0 : index
    %19 = vector.load %arg7[%c0_26, %c0_27] : memref<24x256xf32, #tpu.memory_space<vmem>>, vector<24x256xf32>
    %cst = arith.constant dense<0.000000e+00> : vector<32x256xf32>
    %20 = tpu.matmul %18, %19, %cst {dimension_numbers = #tpu.dot_dimension_numbers<[1], [0], [0], [1], [0, 0, 1, 1], [], []>} : vector<32x24xf32>, vector<24x256xf32>, vector<32x256xf32> -> vector<32x256xf32>
    %c0_28 = arith.constant 0 : index
    %c0_29 = arith.constant 0 : index
    %21 = vector.load %arg4[%c0_28, %c0_29] : memref<32x1xf32, #tpu.memory_space<vmem>>, vector<32x1xf32>
    %22 = vector.broadcast %21 : vector<32x1xf32> to vector<32x256xf32>
    %23 = arith.mulf %20, %22 : vector<32x256xf32>
    %c0_30 = arith.constant 0 : index
    %c0_31 = arith.constant 0 : index
    %24 = vector.load %arg5[%c0_30, %c0_31] : memref<32x1xf32, #tpu.memory_space<vmem>>, vector<32x1xf32>
    %25 = vector.broadcast %24 : vector<32x1xf32> to vector<32x256xf32>
    %26 = arith.addf %23, %25 : vector<32x256xf32>
    %cst_32 = arith.constant 0.000000e+00 : f32
    %27 = vector.broadcast %cst_32 : f32 to vector<32x256xf32>
    %28 = arith.cmpf oge, %26, %27 : vector<32x256xf32>
    %cst_33 = arith.constant 0.00999999977 : f32
    %29 = vector.broadcast %cst_33 : f32 to vector<32x256xf32>
    %30 = arith.mulf %29, %26 : vector<32x256xf32>
    %31 = arith.select %28, %26, %30 : vector<32x256xi1>, vector<32x256xf32>
    %32 = vector.extract_strided_slice %31 {offsets = [0, 0], sizes = [32, 128], strides = [1, 1]} : vector<32x256xf32> to vector<32x128xf32>
    %c0_34 = arith.constant 0 : index
    %c0_35 = arith.constant 0 : index
    %c0_36 = arith.constant 0 : index
    %33 = vector.load %arg6[%c0_34, %c0_35, %c0_36] : memref<2x32x128xf32, #tpu.memory_space<vmem>>, vector<1x32x128xf32>
    %34 = vector.shape_cast %33 : vector<1x32x128xf32> to vector<32x128xf32>
    %35 = vector.shape_cast %32 : vector<32x128xf32> to vector<1x32x128xf32>
    tpu.vector_store %arg6[%c0_34, %c0_35, %c0_36], %35 {strides = array<i32>} : memref<2x32x128xf32, #tpu.memory_space<vmem>>, vector<1x32x128xf32>,
    %36 = vector.extract_strided_slice %31 {offsets = [0, 128], sizes = [32, 128], strides = [1, 1]} : vector<32x256xf32> to vector<32x128xf32>
    %c1_37 = arith.constant 1 : index
    %c0_38 = arith.constant 0 : index
    %c0_39 = arith.constant 0 : index
    %37 = vector.load %arg6[%c1_37, %c0_38, %c0_39] : memref<2x32x128xf32, #tpu.memory_space<vmem>>, vector<1x32x128xf32>
    %38 = vector.shape_cast %37 : vector<1x32x128xf32> to vector<32x128xf32>
    %39 = vector.shape_cast %36 : vector<32x128xf32> to vector<1x32x128xf32>
    tpu.vector_store %arg6[%c1_37, %c0_38, %c0_39], %39 {strides = array<i32>} : memref<2x32x128xf32, #tpu.memory_space<vmem>>, vector<1x32x128xf32>,
    return
  }
  func.func @transform_0(%arg0: i32, %arg1: i32) -> (i32, i32, i32) {
    %c0_i32 = arith.constant 0 : i32
    %c0_i32_0 = arith.constant 0 : i32
    %c0_i32_1 = arith.constant 0 : i32
    return %arg0, %c0_i32, %c0_i32_0 : i32, i32, i32
  }
  func.func @transform_1(%arg0: i32, %arg1: i32) -> (i32, i32) {
    %c0_i32 = arith.constant 0 : i32
    %c0_i32_0 = arith.constant 0 : i32
    return %arg1, %c0_i32 : i32, i32
  }
  func.func @transform_2(%arg0: i32, %arg1: i32) -> (i32, i32) {
    %c0_i32 = arith.constant 0 : i32
    %c0_i32_0 = arith.constant 0 : i32
    return %arg1, %c0_i32 : i32, i32
  }
  func.func @transform_3(%arg0: i32, %arg1: i32) -> (i32, i32) {
    %c0_i32 = arith.constant 0 : i32
    %c0_i32_0 = arith.constant 0 : i32
    return %arg1, %c0_i32 : i32, i32
  }
  func.func @transform_4(%arg0: i32, %arg1: i32) -> (i32, i32, i32) {
    %c0_i32 = arith.constant 0 : i32
    %c0_i32_0 = arith.constant 0 : i32
    return %arg0, %arg1, %c0_i32 : i32, i32, i32
  }
}

</mosaic_0001>

<llo_original>
// kernel: conv1d_norm_leaky_relu_forward.2
$region0: #{conv1d_norm_leaky_relu_forward.2}
  #allocation0 [shape = 'u32[]', space=smem, size = 0x4, offset = 0x4, fixed_abs, tag = 'smem constant byte address 0x4 - core index']
  #allocation1 [shape = 'u32[144,128]{1,0:T(1,128)}', space=vmem, size = 0x12000, scoped, tag = 'internal scratch']
  #allocation2 [shape = 'f32[24,256]{1,0:T(8,128)}', space=vmem, size = 0x6000, scoped, tag = 'scratch operand']
  %s0 = inlined_call_operand.vmem [shape: f32[2,8,130], index: 0, kind: input, shape index: {}]
  %s1 = inlined_call_operand.vmem [shape: f32[32,24], index: 1, kind: input, shape index: {}]
  %s2 = inlined_call_operand.vmem [shape: f32[32,1], index: 2, kind: output, shape index: {0}]
  %s3 = inlined_call_operand.vmem [shape: f32[32,1], index: 3, kind: output, shape index: {1}]
  %4 = xla_tuple %s2, %s3
  %s5 = sld [smem:[#allocation0]]
  $region30: #{conv1d_norm_leaky_relu_forward.2} parent=0
    _
  %s7 = ssub.s32 1, %s5
  %s8 = scalar_select 0, %s7, %s5
  // Predicated region
  $region2: #{conv1d_norm_leaky_relu_forward.2} parent=0 // pred_check
    _
  $region3: #{conv1d_norm_leaky_relu_forward.2} parent=0 // pred_check_branch
    %10 = sbr.rel (0) target = $region5
  $region4: #{conv1d_norm_leaky_relu_forward.2} parent=0 // pred_region
    _
  $region5: #{conv1d_norm_leaky_relu_forward.2} parent=0 // pred_fallthru
    _
  // Predicated region
  $region6: #{conv1d_norm_leaky_relu_forward.2} parent=0 // pred_check
    _
  $region7: #{conv1d_norm_leaky_relu_forward.2} parent=0 // pred_check_branch
    %12 = sbr.rel (0) target = $region9
  $region8: #{conv1d_norm_leaky_relu_forward.2} parent=0 // pred_region
    _
  $region9: #{conv1d_norm_leaky_relu_forward.2} parent=0 // pred_fallthru
    _
  %v13 = vld [vmem:[%s0] sm:$0xff]
  %14 = vst [vmem:[#allocation2] sm:$0xff] %v13
  %v15 = vld [vmem:[%s0] sm:$0xff]
  %v16 = vld [vmem:[%s0 + $0x8] sm:$0xff]
  %19 = vrot.lane.b32.xlu0 %v15, 127
  %v20 = vpop.permute.xlu0 %19
  %21 = vrot.lane.b32.xlu0 %v16, 127
  %v22 = vpop.permute.xlu0 %21
  %vm23 = vcmask 1039360
  %v24 = vsel %vm23, %v20, %v22
  %26 = vst [vmem:[#allocation2 + $0x10] sm:$0xff] %v24
  %v27 = vld [vmem:[%s0] sm:$0xff]
  %v28 = vld [vmem:[%s0 + $0x8] sm:$0xff]
  %31 = vrot.lane.b32.xlu0 %v27, 126
  %v32 = vpop.permute.xlu0 %31
  %33 = vrot.lane.b32.xlu0 %v28, 126
  %v34 = vpop.permute.xlu0 %33
  %vm35 = vcmask 1031168
  %v36 = vsel %vm35, %v32, %v34
  %38 = vst [vmem:[#allocation2 + $0x20] sm:$0xff] %v36
  %s39 = scalar_lea.vmem %s0, 16
  %v40 = vld [vmem:[%s39] sm:$0xff]
  %41 = vst [vmem:[#allocation2 + $0x8] sm:$0xff] %v40
  %v42 = vld [vmem:[%s39] sm:$0xff]
  %v43 = vld [vmem:[%s39 + $0x8] sm:$0xff]
  %46 = vrot.lane.b32.xlu0 %v42, 127
  %v47 = vpop.permute.xlu0 %46
  %48 = vrot.lane.b32.xlu0 %v43, 127
  %v49 = vpop.permute.xlu0 %48
  %v50 = vsel %vm23, %v47, %v49
  %52 = vst [vmem:[#allocation2 + $0x18] sm:$0xff] %v50
  %v53 = vld [vmem:[%s39] sm:$0xff]
  %v54 = vld [vmem:[%s39 + $0x8] sm:$0xff]
  %57 = vrot.lane.b32.xlu0 %v53, 126
  %v58 = vpop.permute.xlu0 %57
  %59 = vrot.lane.b32.xlu0 %v54, 126
  %v60 = vpop.permute.xlu0 %59
  %v61 = vsel %vm35, %v58, %v60
  %63 = vst [vmem:[#allocation2 + $0x28] sm:$0xff] %v61
  %v64 = vld [vmem:[%s1] sm:$0xff]
  %v65 = vld [vmem:[%s1 + $0x8] sm:$0xff]
  %v66 = vld [vmem:[%s1 + $0x10] sm:$0xff]
  %v67 = vld [vmem:[%s1 + $0x18] sm:$0xff]
  %v68 = vld [vmem:[#allocation2] sm:$0xff]
  %v69 = vld [vmem:[#allocation2 + $0x8] sm:$0xff]
  %v70 = vld [vmem:[#allocation2 + $0x10] sm:$0xff]
  %v71 = vld [vmem:[#allocation2 + $0x18] sm:$0xff]
  %v72 = vld [vmem:[#allocation2 + $0x20] sm:$0xff]
  %v73 = vld [vmem:[#allocation2 + $0x28] sm:$0xff]
  %vm74 = vcmask 195584
  %v76 = vsel %vm74, %v64, 0
  %v79 = vsel %vm74, %v65, 0
  %v82 = vsel %vm74, %v66, 0
  %v85 = vsel %vm74, %v67, 0
  %87 = vmatprep.subr.mxu0 %v69
  %88 = vmatpush1.msra.mxu0 %v68
  %89 = vmatprep.subr.mxu0 %v71
  %90 = vmatpush1.msra.mxu0 %v70
  %91 = vmatprep.subr.mxu0 %v73
  %92 = vmatpush1.msra.mxu0 %v72
  %93 = vmatprep.subr.mxu0 0.0
  %94 = vmatpush1.msra.mxu0 0.0
  %95 = vmatprep.subr.mxu0 0.0
  %96 = vmatpush1.msra.mxu0 0.0
  %97 = vmatprep.subr.mxu0 0.0
  %98 = vmatpush1.msra.mxu0 0.0
  %99 = vmatprep.subr.mxu0 0.0
  %100 = vmatpush1.msra.mxu0 0.0
  %101 = vmatprep.subr.mxu0 0.0
  %102 = vmatpush1.msra.mxu0 0.0
  %103 = vmatprep.subr.mxu0 0.0
  %104 = vmatpush1.msra.mxu0 0.0
  %105 = vmatprep.subr.mxu0 0.0
  %106 = vmatpush1.msra.mxu0 0.0
  %107 = vmatprep.subr.mxu0 0.0
  %108 = vmatpush1.msra.mxu0 0.0
  %109 = vmatprep.subr.mxu0 0.0
  %110 = vmatpush1.msra.mxu0 0.0
  %111 = vmatprep.subr.mxu0 0.0
  %112 = vmatpush1.msra.mxu0 0.0
  %113 = vmatprep.subr.mxu0 0.0
  %114 = vmatpush1.msra.mxu0 0.0
  %115 = vmatprep.subr.mxu0 0.0
  %116 = vmatpush1.msra.mxu0 0.0
  %117 = vmatprep.subr.mxu0 0.0
  %118 = vmatpush1.msra.mxu0 0.0
  %119 = vmatprep.subr.mxu0 0.0
  %120 = vmatpush1.msra.mxu0 0.0
  %121 = vmatprep.subr.mxu0 0.0
  %122 = vmatpush1.msra.mxu0 0.0
  %123 = vmatprep.subr.mxu0 0.0
  %124 = vmatpush1.msra.mxu0 0.0
  %125 = vmatprep.subr.mxu0 0.0
  %126 = vmatpush1.msra.mxu0 0.0
  %127 = vmatprep.subr.mxu0 0.0
  %128 = vmatpush1.msra.mxu0 0.0
  %129 = vmatprep.subr.mxu0 0.0
  %130 = vmatpush1.msra.mxu0 0.0
  %131 = vmatprep.subr.mxu0 0.0
  %132 = vmatpush1.msra.mxu0 0.0
  %133 = vmatprep.subr.mxu0 0.0
  %134 = vmatpush1.msra.mxu0 0.0
  %135 = vmatprep.subr.mxu0 0.0
  %136 = vmatpush1.msra.mxu0 0.0
  %137 = vmatprep.subr.mxu0 0.0
  %138 = vmatpush1.msra.mxu0 0.0
  %139 = vmatprep.subr.mxu0 0.0
  %140 = vmatpush1.msra.mxu0 0.0
  %141 = vmatprep.subr.mxu0 0.0
  %142 = vmatpush1.msra.mxu0 0.0
  %143 = vmatprep.subr.mxu0 0.0
  %144 = vmatpush1.msra.mxu0 0.0
  %145 = vmatprep.subr.mxu0 0.0
  %146 = vmatpush1.msra.mxu0 0.0
  %147 = vmatprep.subr.mxu0 0.0
  %148 = vmatpush1.msra.mxu0 0.0
  %149 = vmatprep.subr.mxu0 0.0
  %150 = vmatpush1.msra.mxu0 0.0
  %151 = vmatprep.mubr.f32.mxu0 0.0
  %152 = vmatmul.mubr.f32.gmra.mrb[0].mxu0 %v76
  %v153 = vpop.f32.mrb[0].mxu0
  %v154 = vadd.f32 0.0, %v153
  %v155 = vpop.f32.mrb[0].mxu0
  %v156 = vadd.f32 0.0, %v155
  %157 = vmatprep.mubr.f32.mxu0 0.0
  %158 = vmatmul.mubr.f32.gmra.mrb[0].mxu0 %v79
  %v159 = vpop.f32.mrb[0].mxu0
  %v160 = vadd.f32 0.0, %v159
  %v161 = vpop.f32.mrb[0].mxu0
  %v162 = vadd.f32 0.0, %v161
  %163 = vmatprep.mubr.f32.mxu0 0.0
  %164 = vmatmul.mubr.f32.gmra.mrb[0].mxu0 %v82
  %v165 = vpop.f32.mrb[0].mxu0
  %v166 = vadd.f32 0.0, %v165
  %v167 = vpop.f32.mrb[0].mxu0
  %v168 = vadd.f32 0.0, %v167
  %169 = vmatprep.mubr.f32.mxu0 0.0
  %170 = vmatmul.mubr.f32.gmra.mrb[0].mxu0 %v85
  %v171 = vpop.f32.mrb[0].mxu0
  %v172 = vadd.f32 0.0, %v171
  %v173 = vpop.f32.mrb[0].mxu0
  %v174 = vadd.f32 0.0, %v173
  %175 = vdwg.mxu0
  %p176 = scmp.eq.s32.totalorder 0, 0
  // Predicated region
  $region10: #{conv1d_norm_leaky_relu_forward.2} parent=0 // pred_check
    %p177 = pneg %p176
  $region11: #{conv1d_norm_leaky_relu_forward.2} parent=0 // pred_check_branch
    %179 = sbr.rel (%p177) target = $region13
  $region12: #{conv1d_norm_leaky_relu_forward.2} parent=0 // pred_region
    %vm180 = vcmask 7168
    %181 = vst.msk [vmem:[%s2] sm:$0xff] %vm180, 0.0
    %182 = vst.msk [vmem:[%s2 + $0x8] sm:$0xff] %vm180, 0.0
    %183 = vst.msk [vmem:[%s2 + $0x10] sm:$0xff] %vm180, 0.0
    %184 = vst.msk [vmem:[%s2 + $0x18] sm:$0xff] %vm180, 0.0
    %185 = vst.msk [vmem:[%s3] sm:$0xff] %vm180, 0.0
    %186 = vst.msk [vmem:[%s3 + $0x8] sm:$0xff] %vm180, 0.0
    %187 = vst.msk [vmem:[%s3 + $0x10] sm:$0xff] %vm180, 0.0
    %188 = vst.msk [vmem:[%s3 + $0x18] sm:$0xff] %vm180, 0.0
  $region13: #{conv1d_norm_leaky_relu_forward.2} parent=0 // pred_fallthru
    _
  %v189 = vld [vmem:[%s2] sm:$0xff]
  %v190 = vld [vmem:[%s2 + $0x8] sm:$0xff]
  %v191 = vld [vmem:[%s2 + $0x10] sm:$0xff]
  %v192 = vld [vmem:[%s2 + $0x18] sm:$0xff]
  %v193 = vadd.f32 %v154, %v156
  %194 = vadd.xlane.f32.xlu0 %v193
  %v195 = vpop.xlane.xlu0 %194
  %v196 = vadd.f32 %v160, %v162
  %197 = vadd.xlane.f32.xlu0 %v196
  %v198 = vpop.xlane.xlu0 %197
  %v199 = vadd.f32 %v166, %v168
  %200 = vadd.xlane.f32.xlu0 %v199
  %v201 = vpop.xlane.xlu0 %200
  %v202 = vadd.f32 %v172, %v174
  %203 = vadd.xlane.f32.xlu0 %v202
  %v204 = vpop.xlane.xlu0 %203
  %v205 = vadd.f32 %v189, %v195
  %v206 = vadd.f32 %v190, %v198
  %v207 = vadd.f32 %v191, %v201
  %v208 = vadd.f32 %v192, %v204
  %vm209 = vcmask 7168
  %210 = vst.msk [vmem:[%s2] sm:$0xff] %vm209, %v205
  %211 = vst.msk [vmem:[%s2 + $0x8] sm:$0xff] %vm209, %v206
  %212 = vst.msk [vmem:[%s2 + $0x10] sm:$0xff] %vm209, %v207
  %213 = vst.msk [vmem:[%s2 + $0x18] sm:$0xff] %vm209, %v208
  %v214 = vld [vmem:[%s3] sm:$0xff]
  %v215 = vld [vmem:[%s3 + $0x8] sm:$0xff]
  %v216 = vld [vmem:[%s3 + $0x10] sm:$0xff]
  %v217 = vld [vmem:[%s3 + $0x18] sm:$0xff]
  %v218 = vmul.f32 %v154, %v154
  %v219 = vmul.f32 %v156, %v156
  %v220 = vmul.f32 %v160, %v160
  %v221 = vmul.f32 %v162, %v162
  %v222 = vmul.f32 %v166, %v166
  %v223 = vmul.f32 %v168, %v168
  %v224 = vmul.f32 %v172, %v172
  %v225 = vmul.f32 %v174, %v174
  %v226 = vadd.f32 %v218, %v219
  %227 = vadd.xlane.f32.xlu0 %v226
  %v228 = vpop.xlane.xlu0 %227
  %v229 = vadd.f32 %v220, %v221
  %230 = vadd.xlane.f32.xlu0 %v229
  %v231 = vpop.xlane.xlu0 %230
  %v232 = vadd.f32 %v222, %v223
  %233 = vadd.xlane.f32.xlu0 %v232
  %v234 = vpop.xlane.xlu0 %233
  %v235 = vadd.f32 %v224, %v225
  %236 = vadd.xlane.f32.xlu0 %v235
  %v237 = vpop.xlane.xlu0 %236
  %v238 = vadd.f32 %v214, %v228
  %v239 = vadd.f32 %v215, %v231
  %v240 = vadd.f32 %v216, %v234
  %v241 = vadd.f32 %v217, %v237
  %242 = vst.msk [vmem:[%s3] sm:$0xff] %vm209, %v238
  %243 = vst.msk [vmem:[%s3 + $0x8] sm:$0xff] %vm209, %v239
  %244 = vst.msk [vmem:[%s3 + $0x10] sm:$0xff] %vm209, %v240
  %245 = vst.msk [vmem:[%s3 + $0x18] sm:$0xff] %vm209, %v241
  // Predicated region
  $region14: #{conv1d_norm_leaky_relu_forward.2} parent=0 // pred_check
    _
  $region15: #{conv1d_norm_leaky_relu_forward.2} parent=0 // pred_check_branch
    %247 = sbr.rel (0) target = $region17
  $region16: #{conv1d_norm_leaky_relu_forward.2} parent=0 // pred_region
    _
  $region17: #{conv1d_norm_leaky_relu_forward.2} parent=0 // pred_fallthru
    _
  // Predicated region
  $region18: #{conv1d_norm_leaky_relu_forward.2} parent=0 // pred_check
    _
  $region19: #{conv1d_norm_leaky_relu_forward.2} parent=0 // pred_check_branch
    %249 = sbr.rel (0) target = $region21
  $region20: #{conv1d_norm_leaky_relu_forward.2} parent=0 // pred_region
    _
  $region21: #{conv1d_norm_leaky_relu_forward.2} parent=0 // pred_fallthru
    _
  // Predicated region
  $region22: #{conv1d_norm_leaky_relu_forward.2} parent=0 // pred_check
    _
  $region23: #{conv1d_norm_leaky_relu_forward.2} parent=0 // pred_check_branch
    %251 = sbr.rel (0) target = $region25
  $region24: #{conv1d_norm_leaky_relu_forward.2} parent=0 // pred_region
    _
  $region25: #{conv1d_norm_leaky_relu_forward.2} parent=0 // pred_fallthru
    _
  // Predicated region
  $region26: #{conv1d_norm_leaky_relu_forward.2} parent=0 // pred_check
    _
  $region27: #{conv1d_norm_leaky_relu_forward.2} parent=0 // pred_check_branch
    %253 = sbr.rel (0) target = $region29
  $region28: #{conv1d_norm_leaky_relu_forward.2} parent=0 // pred_region
    _
  $region29: #{conv1d_norm_leaky_relu_forward.2} parent=0 // pred_fallthru
    _

// kernel: conv1d_norm_leaky_relu_forward.3
$region0: #{conv1d_norm_leaky_relu_forward.3}
  #allocation0 [shape = 'u32[]', space=smem, size = 0x4, offset = 0x4, fixed_abs, tag = 'smem constant byte address 0x4 - core index']
  #allocation1 [shape = 'u32[144,128]{1,0:T(1,128)}', space=vmem, size = 0x12000, scoped, tag = 'internal scratch']
  #allocation2 [shape = 'f32[24,256]{1,0:T(8,128)}', space=vmem, size = 0x6000, scoped, tag = 'scratch operand']
  %s0 = inlined_call_operand.vmem [shape: f32[2,8,130], index: 0, kind: input, shape index: {}]
  %s1 = inlined_call_operand.vmem [shape: f32[32,24], index: 1, kind: input, shape index: {}]
  %s2 = inlined_call_operand.vmem [shape: f32[32,1], index: 2, kind: input, shape index: {}]
  %s3 = inlined_call_operand.vmem [shape: f32[32,1], index: 3, kind: input, shape index: {}]
  %s4 = inlined_call_operand.hbm [shape: f32[2,32,128], index: 4, kind: output, shape index: {}]
  %s5 = sld [smem:[#allocation0]]
  $region26: #{conv1d_norm_leaky_relu_forward.3} parent=0
    _
  %s7 = ssub.s32 1, %s5
  %s8 = scalar_select 0, %s7, %s5
  $region1: #{conv1d_norm_leaky_relu_forward.3} parent=0
    #allocation3 [shape = 'u8[32768]{0}', space=vmem, size = 0x8000, scoped, tag = 'output window, operand 0, single buffered']
    #allocation4 [shape = 's32[1]{0}', space=sflag, size = 0x4, scoped, tag = 'scoped memory for conv1d_norm_leaky_relu_forward.3']
    %9 = vsyncpa [#allocation4], 0
    // Predicated region
    $region2: #{conv1d_norm_leaky_relu_forward.3} parent=1 // pred_check
      _
    $region3: #{conv1d_norm_leaky_relu_forward.3} parent=1 // pred_check_branch
      %11 = sbr.rel (0) target = $region5
    $region4: #{conv1d_norm_leaky_relu_forward.3} parent=1 // pred_region
      _
    $region5: #{conv1d_norm_leaky_relu_forward.3} parent=1 // pred_fallthru
      _
    // Predicated region
    $region6: #{conv1d_norm_leaky_relu_forward.3} parent=1 // pred_check
      _
    $region7: #{conv1d_norm_leaky_relu_forward.3} parent=1 // pred_check_branch
      %13 = sbr.rel (0) target = $region9
    $region8: #{conv1d_norm_leaky_relu_forward.3} parent=1 // pred_region
      _
    $region9: #{conv1d_norm_leaky_relu_forward.3} parent=1 // pred_fallthru
      _
    // Predicated region
    $region10: #{conv1d_norm_leaky_relu_forward.3} parent=1 // pred_check
      _
    $region11: #{conv1d_norm_leaky_relu_forward.3} parent=1 // pred_check_branch
      %15 = sbr.rel (0) target = $region13
    $region12: #{conv1d_norm_leaky_relu_forward.3} parent=1 // pred_region
      _
    $region13: #{conv1d_norm_leaky_relu_forward.3} parent=1 // pred_fallthru
      _
    // Predicated region
    $region14: #{conv1d_norm_leaky_relu_forward.3} parent=1 // pred_check
      _
    $region15: #{conv1d_norm_leaky_relu_forward.3} parent=1 // pred_check_branch
      %17 = sbr.rel (0) target = $region17
    $region16: #{conv1d_norm_leaky_relu_forward.3} parent=1 // pred_region
      _
    $region17: #{conv1d_norm_leaky_relu_forward.3} parent=1 // pred_fallthru
      _
    %v18 = vld [vmem:[%s0] sm:$0xff]
    %19 = vst [vmem:[#allocation2] sm:$0xff] %v18
    %v20 = vld [vmem:[%s0] sm:$0xff]
    %v21 = vld [vmem:[%s0 + $0x8] sm:$0xff]
    %24 = vrot.lane.b32.xlu0 %v20, 127
    %v25 = vpop.permute.xlu0 %24
    %26 = vrot.lane.b32.xlu0 %v21, 127
    %v27 = vpop.permute.xlu0 %26
    %vm28 = vcmask 1039360
    %v29 = vsel %vm28, %v25, %v27
    %31 = vst [vmem:[#allocation2 + $0x10] sm:$0xff] %v29
    %v32 = vld [vmem:[%s0] sm:$0xff]
    %v33 = vld [vmem:[%s0 + $0x8] sm:$0xff]
    %36 = vrot.lane.b32.xlu0 %v32, 126
    %v37 = vpop.permute.xlu0 %36
    %38 = vrot.lane.b32.xlu0 %v33, 126
    %v39 = vpop.permute.xlu0 %38
    %vm40 = vcmask 1031168
    %v41 = vsel %vm40, %v37, %v39
    %43 = vst [vmem:[#allocation2 + $0x20] sm:$0xff] %v41
    %s44 = scalar_lea.vmem %s0, 16
    %v45 = vld [vmem:[%s44] sm:$0xff]
    %46 = vst [vmem:[#allocation2 + $0x8] sm:$0xff] %v45
    %v47 = vld [vmem:[%s44] sm:$0xff]
    %v48 = vld [vmem:[%s44 + $0x8] sm:$0xff]
    %51 = vrot.lane.b32.xlu0 %v47, 127
    %v52 = vpop.permute.xlu0 %51
    %53 = vrot.lane.b32.xlu0 %v48, 127
    %v54 = vpop.permute.xlu0 %53
    %v55 = vsel %vm28, %v52, %v54
    %57 = vst [vmem:[#allocation2 + $0x18] sm:$0xff] %v55
    %v58 = vld [vmem:[%s44] sm:$0xff]
    %v59 = vld [vmem:[%s44 + $0x8] sm:$0xff]
    %62 = vrot.lane.b32.xlu0 %v58, 126
    %v63 = vpop.permute.xlu0 %62
    %64 = vrot.lane.b32.xlu0 %v59, 126
    %v65 = vpop.permute.xlu0 %64
    %v66 = vsel %vm40, %v63, %v65
    %68 = vst [vmem:[#allocation2 + $0x28] sm:$0xff] %v66
    %v69 = vld [vmem:[%s1] sm:$0xff]
    %v70 = vld [vmem:[%s1 + $0x8] sm:$0xff]
    %v71 = vld [vmem:[%s1 + $0x10] sm:$0xff]
    %v72 = vld [vmem:[%s1 + $0x18] sm:$0xff]
    %v73 = vld [vmem:[#allocation2] sm:$0xff]
    %v74 = vld [vmem:[#allocation2 + $0x8] sm:$0xff]
    %v75 = vld [vmem:[#allocation2 + $0x10] sm:$0xff]
    %v76 = vld [vmem:[#allocation2 + $0x18] sm:$0xff]
    %v77 = vld [vmem:[#allocation2 + $0x20] sm:$0xff]
    %v78 = vld [vmem:[#allocation2 + $0x28] sm:$0xff]
    %vm79 = vcmask 195584
    %v81 = vsel %vm79, %v69, 0
    %v84 = vsel %vm79, %v70, 0
    %v87 = vsel %vm79, %v71, 0
    %v90 = vsel %vm79, %v72, 0
    %92 = vmatprep.subr.mxu0 %v74
    %93 = vmatpush1.msra.mxu0 %v73
    %94 = vmatprep.subr.mxu0 %v76
    %95 = vmatpush1.msra.mxu0 %v75
    %96 = vmatprep.subr.mxu0 %v78
    %97 = vmatpush1.msra.mxu0 %v77
    %98 = vmatprep.subr.mxu0 0.0
    %99 = vmatpush1.msra.mxu0 0.0
    %100 = vmatprep.subr.mxu0 0.0
    %101 = vmatpush1.msra.mxu0 0.0
    %102 = vmatprep.subr.mxu0 0.0
    %103 = vmatpush1.msra.mxu0 0.0
    %104 = vmatprep.subr.mxu0 0.0
    %105 = vmatpush1.msra.mxu0 0.0
    %106 = vmatprep.subr.mxu0 0.0
    %107 = vmatpush1.msra.mxu0 0.0
    %108 = vmatprep.subr.mxu0 0.0
    %109 = vmatpush1.msra.mxu0 0.0
    %110 = vmatprep.subr.mxu0 0.0
    %111 = vmatpush1.msra.mxu0 0.0
    %112 = vmatprep.subr.mxu0 0.0
    %113 = vmatpush1.msra.mxu0 0.0
    %114 = vmatprep.subr.mxu0 0.0
    %115 = vmatpush1.msra.mxu0 0.0
    %116 = vmatprep.subr.mxu0 0.0
    %117 = vmatpush1.msra.mxu0 0.0
    %118 = vmatprep.subr.mxu0 0.0
    %119 = vmatpush1.msra.mxu0 0.0
    %120 = vmatprep.subr.mxu0 0.0
    %121 = vmatpush1.msra.mxu0 0.0
    %122 = vmatprep.subr.mxu0 0.0
    %123 = vmatpush1.msra.mxu0 0.0
    %124 = vmatprep.subr.mxu0 0.0
    %125 = vmatpush1.msra.mxu0 0.0
    %126 = vmatprep.subr.mxu0 0.0
    %127 = vmatpush1.msra.mxu0 0.0
    %128 = vmatprep.subr.mxu0 0.0
    %129 = vmatpush1.msra.mxu0 0.0
    %130 = vmatprep.subr.mxu0 0.0
    %131 = vmatpush1.msra.mxu0 0.0
    %132 = vmatprep.subr.mxu0 0.0
    %133 = vmatpush1.msra.mxu0 0.0
    %134 = vmatprep.subr.mxu0 0.0
    %135 = vmatpush1.msra.mxu0 0.0
    %136 = vmatprep.subr.mxu0 0.0
    %137 = vmatpush1.msra.mxu0 0.0
    %138 = vmatprep.subr.mxu0 0.0
    %139 = vmatpush1.msra.mxu0 0.0
    %140 = vmatprep.subr.mxu0 0.0
    %141 = vmatpush1.msra.mxu0 0.0
    %142 = vmatprep.subr.mxu0 0.0
    %143 = vmatpush1.msra.mxu0 0.0
    %144 = vmatprep.subr.mxu0 0.0
    %145 = vmatpush1.msra.mxu0 0.0
    %146 = vmatprep.subr.mxu0 0.0
    %147 = vmatpush1.msra.mxu0 0.0
    %148 = vmatprep.subr.mxu0 0.0
    %149 = vmatpush1.msra.mxu0 0.0
    %150 = vmatprep.subr.mxu0 0.0
    %151 = vmatpush1.msra.mxu0 0.0
    %152 = vmatprep.subr.mxu0 0.0
    %153 = vmatpush1.msra.mxu0 0.0
    %154 = vmatprep.subr.mxu0 0.0
    %155 = vmatpush1.msra.mxu0 0.0
    %156 = vmatprep.mubr.f32.mxu0 0.0
    %157 = vmatmul.mubr.f32.gmra.mrb[0].mxu0 %v81
    %v158 = vpop.f32.mrb[0].mxu0
    %v159 = vadd.f32 0.0, %v158
    %v160 = vpop.f32.mrb[0].mxu0
    %v161 = vadd.f32 0.0, %v160
    %162 = vmatprep.mubr.f32.mxu0 0.0
    %163 = vmatmul.mubr.f32.gmra.mrb[0].mxu0 %v84
    %v164 = vpop.f32.mrb[0].mxu0
    %v165 = vadd.f32 0.0, %v164
    %v166 = vpop.f32.mrb[0].mxu0
    %v167 = vadd.f32 0.0, %v166
    %168 = vmatprep.mubr.f32.mxu0 0.0
    %169 = vmatmul.mubr.f32.gmra.mrb[0].mxu0 %v87
    %v170 = vpop.f32.mrb[0].mxu0
    %v171 = vadd.f32 0.0, %v170
    %v172 = vpop.f32.mrb[0].mxu0
    %v173 = vadd.f32 0.0, %v172
    %174 = vmatprep.mubr.f32.mxu0 0.0
    %175 = vmatmul.mubr.f32.gmra.mrb[0].mxu0 %v90
    %v176 = vpop.f32.mrb[0].mxu0
    %v177 = vadd.f32 0.0, %v176
    %v178 = vpop.f32.mrb[0].mxu0
    %v179 = vadd.f32 0.0, %v178
    %180 = vdwg.mxu0
    %v181 = vld [vmem:[%s2] sm:$0xff]
    %v182 = vld [vmem:[%s2 + $0x8] sm:$0xff]
    %v183 = vld [vmem:[%s2 + $0x10] sm:$0xff]
    %v184 = vld [vmem:[%s2 + $0x18] sm:$0xff]
    %186 = vset.pattern.permute.xlu0 0
    %187 = vperm.xlu0 %186, %v181
    %v188 = vpop.permute.xlu0 %187
    %191 = vset.pattern.permute.xlu0 0
    %192 = vperm.xlu0 %191, %v182
    %v193 = vpop.permute.xlu0 %192
    %196 = vset.pattern.permute.xlu0 0
    %197 = vperm.xlu0 %196, %v183
    %v198 = vpop.permute.xlu0 %197
    %201 = vset.pattern.permute.xlu0 0
    %202 = vperm.xlu0 %201, %v184
    %v203 = vpop.permute.xlu0 %202
    %v205 = vmul.f32 %v159, %v188
    %v206 = vmul.f32 %v161, %v188
    %v207 = vmul.f32 %v165, %v193
    %v208 = vmul.f32 %v167, %v193
    %v209 = vmul.f32 %v171, %v198
    %v210 = vmul.f32 %v173, %v198
    %v211 = vmul.f32 %v177, %v203
    %v212 = vmul.f32 %v179, %v203
    %v213 = vld [vmem:[%s3] sm:$0xff]
    %v214 = vld [vmem:[%s3 + $0x8] sm:$0xff]
    %v215 = vld [vmem:[%s3 + $0x10] sm:$0xff]
    %v216 = vld [vmem:[%s3 + $0x18] sm:$0xff]
    %218 = vset.pattern.permute.xlu0 0
    %219 = vperm.xlu0 %218, %v213
    %v220 = vpop.permute.xlu0 %219
    %223 = vset.pattern.permute.xlu0 0
    %224 = vperm.xlu0 %223, %v214
    %v225 = vpop.permute.xlu0 %224
    %228 = vset.pattern.permute.xlu0 0
    %229 = vperm.xlu0 %228, %v215
    %v230 = vpop.permute.xlu0 %229
    %233 = vset.pattern.permute.xlu0 0
    %234 = vperm.xlu0 %233, %v216
    %v235 = vpop.permute.xlu0 %234
    %v237 = vadd.f32 %v205, %v220
    %v238 = vadd.f32 %v206, %v220
    %v239 = vadd.f32 %v207, %v225
    %v240 = vadd.f32 %v208, %v225
    %v241 = vadd.f32 %v209, %v230
    %v242 = vadd.f32 %v210, %v230
    %v243 = vadd.f32 %v211, %v235
    %v244 = vadd.f32 %v212, %v235
    %vm245 = vcmp.ge.f32.partialorder %v237, 0.0
    %vm246 = vcmp.ge.f32.partialorder %v238, 0.0
    %vm247 = vcmp.ge.f32.partialorder %v239, 0.0
    %vm248 = vcmp.ge.f32.partialorder %v240, 0.0
    %vm249 = vcmp.ge.f32.partialorder %v241, 0.0
    %vm250 = vcmp.ge.f32.partialorder %v242, 0.0
    %vm251 = vcmp.ge.f32.partialorder %v243, 0.0
    %vm252 = vcmp.ge.f32.partialorder %v244, 0.0
    %v253 = vmul.f32 %v237, 0.01
    %v254 = vmul.f32 %v238, 0.01
    %v255 = vmul.f32 %v239, 0.01
    %v256 = vmul.f32 %v240, 0.01
    %v257 = vmul.f32 %v241, 0.01
    %v258 = vmul.f32 %v242, 0.01
    %v259 = vmul.f32 %v243, 0.01
    %v260 = vmul.f32 %v244, 0.01
    %v261 = vsel %vm245, %v237, %v253
    %v262 = vsel %vm246, %v238, %v254
    %v263 = vsel %vm247, %v239, %v255
    %v264 = vsel %vm248, %v240, %v256
    %v265 = vsel %vm249, %v241, %v257
    %v266 = vsel %vm250, %v242, %v258
    %v267 = vsel %vm251, %v243, %v259
    %v268 = vsel %vm252, %v244, %v260
    %269 = vst [vmem:[#allocation3] sm:$0xff] %v261
    %270 = vst [vmem:[#allocation3 + $0x8] sm:$0xff] %v263
    %271 = vst [vmem:[#allocation3 + $0x10] sm:$0xff] %v265
    %272 = vst [vmem:[#allocation3 + $0x18] sm:$0xff] %v267
    %s273 = scalar_lea.vmem [#allocation3], 32
    %274 = vst [vmem:[%s273] sm:$0xff] %v262
    %275 = vst [vmem:[%s273 + $0x8] sm:$0xff] %v264
    %276 = vst [vmem:[%s273 + $0x10] sm:$0xff] %v266
    %277 = vst [vmem:[%s273 + $0x18] sm:$0xff] %v268
    // Predicated region
    $region18: #{conv1d_norm_leaky_relu_forward.3} parent=1 // pred_check
      _
    $region19: #{conv1d_norm_leaky_relu_forward.3} parent=1 // pred_check_branch
      %279 = sbr.rel (0) target = $region21
    $region20: #{conv1d_norm_leaky_relu_forward.3} parent=1 // pred_region
      %s281 = ssub.s32 1024, 1024
      %282 = vsyncadd [#allocation4], %s281
      %s283 = sshll.u32 [#allocation3], 4
      %s284 = int_to_ptr.vmem [resolvable:$true] %s283
      %289 = dma.vmem_to_hbm [thread:$0]  %s284, 1024, %s4, [#allocation4], 128, 128, 8
    $region21: #{conv1d_norm_leaky_relu_forward.3} parent=1 // pred_fallthru
      _
    // Predicated region
    $region22: #{conv1d_norm_leaky_relu_forward.3} parent=1 // pred_check
      _
    $region23: #{conv1d_norm_leaky_relu_forward.3} parent=1 // pred_check_branch
      %291 = sbr.rel (0) target = $region25
    $region24: #{conv1d_norm_leaky_relu_forward.3} parent=1 // pred_region
      %292 = dma.done [#allocation4], 1024
    $region25: #{conv1d_norm_leaky_relu_forward.3} parent=1 // pred_fallthru
      _
    %293 = vsyncpa [#allocation4], 1

</llo_original>
